<compile_context>
chip_gen: v5e
topology: v5e:2x2
jax: 0.10.0
libtpu: 0.0.40
codegen_flags: <defaults>
</compile_context>

<pallas_src>
import functools

import jax
import jax.numpy as jnp
from jax.experimental import pallas as pl
from jax.experimental.pallas import tpu as pltpu

_LANE = 128


def _round_up(v, m):
    return ((v + m - 1) // m) * m


def _tpu_vmem_capacity():
    """Per-core VMEM bytes; conservative 64 MiB (v7x) fallback if query fails."""
    try:
        cap = int(pltpu.get_tpu_info().vmem_capacity_bytes)
        if cap > 0:
            return cap
    except Exception:
        pass
    return 64 << 20


def _vmem_limit(nbytes, vmem_cap):
    hi = max(vmem_cap - (8 << 20), 32 << 20)
    return int(min(max(nbytes + (4 << 20), 16 << 20), hi))


def _pick_hw_tile(C, HW, dsize, blk_target):
    """Lane-dense HW tile (multiple of 128), sized ~blk_target bytes and chosen to
    balance tiles (minimize ragged-tail waste)."""
    max_lanes = max(_LANE, ((blk_target // max(C * dsize, 1)) // _LANE) * _LANE)
    hw128 = _round_up(HW, _LANE)
    if hw128 <= max_lanes:
        return int(hw128), 1
    n = pl.cdiv(hw128, max_lanes)
    thw = _round_up(pl.cdiv(HW, n), _LANE)
    n = pl.cdiv(HW, thw)
    return int(thw), int(n)


# -----------------------------------------------------------------------------
# Fused single-pass kernel: per-batch slab resident in VMEM.
# -----------------------------------------------------------------------------
def _fused_se_kernel(x_ref, w1_ref, w2_ref, o_ref, *, inv_hw):
    # x_ref/o_ref: [1, C, HW] (native dtype); w1: [hidden, C] f32; w2: [C, hidden] f32
    x = x_ref[0]                                                         # [C, HW]
    z = jnp.sum(x.astype(jnp.float32), axis=-1, keepdims=True) * inv_hw  # [C, 1]
    h = jnp.maximum(
        jnp.dot(w1_ref[...], z, preferred_element_type=jnp.float32), 0.0)  # [hidden,1]
    att = jax.nn.sigmoid(
        jnp.dot(w2_ref[...], h, preferred_element_type=jnp.float32))       # [C, 1]
    # Gate in x's dtype (bf16 inputs gate in bf16 -- intentional, slightly lossy
    # vs the fp32 PyTorch reference; exact for f32).
    o_ref[0] = x * att.astype(x.dtype)


# -----------------------------------------------------------------------------
# Two-pass path, pass 1: streaming channel sums (squeeze).
# -----------------------------------------------------------------------------
def _sum_kernel(x_ref, sums_ref, acc_ref, *, hw, thw, needs_mask):
    # x_ref:    [1, C, thw] native dtype (last tile may be partial / garbage lanes)
    # sums_ref: [1, C, 1]   f32 (resident across the hw axis, written once per b)
    # acc_ref:  [C, thw]    f32 wide accumulator (VPU adds; one XLU reduce at end)
    t = pl.program_id(1)

    @pl.when(t == 0)
    def _():
        acc_ref[...] = jnp.zeros_like(acc_ref)

    x = x_ref[0]
    if needs_mask:
        valid = hw - t * thw
        mask = jax.lax.broadcasted_iota(jnp.int32, x.shape, 1) < valid
        x = jnp.where(mask, x, jnp.zeros_like(x))
    acc_ref[...] += x.astype(jnp.float32)

    @pl.when(t == pl.num_programs(1) - 1)
    def _():
        sums_ref[0] = jnp.sum(acc_ref[...], axis=-1, keepdims=True)


# -----------------------------------------------------------------------------
# Two-pass path, pass 2: streaming per-channel gate.
# -----------------------------------------------------------------------------
def _gate_kernel(att_ref, x_ref, o_ref):
    # att_ref: [1, C, 1] f32; x_ref/o_ref: [1, C, thw] native dtype
    x = x_ref[0]
    o_ref[0] = x * att_ref[0].astype(x.dtype)


# -----------------------------------------------------------------------------
# Wrapper
# -----------------------------------------------------------------------------
def temporal_squeeze_excitation(x_nchw, w1, w2, *,
                                _force_two_pass=False, _thw_override=None):
    """x_nchw: [B, C, H, W]; w1: [hidden, C]; w2: [C, hidden] -> [B, C, H, W]."""
    B, C, H, W = x_nchw.shape
    HW = H * W
    hidden = w1.shape[0]
    dsize = jnp.dtype(x_nchw.dtype).itemsize

    vmem_cap = _tpu_vmem_capacity()
    # ~4 MiB blocks on 64 MiB-VMEM chips (v7x), ~8 MiB on 128 MiB chips (v5e/v6e).
    blk_target = (4 << 20) if vmem_cap <= (64 << 20) else (8 << 20)

    x = x_nchw.reshape(B, C, HW)          # no padding, no extra copies
    w1f = w1.astype(jnp.float32)
    w2f = w2.astype(jnp.float32)
    w_bytes = 2 * hidden * C * 4

    slab_bytes = C * HW * dsize
    fused_budget = min(vmem_cap - (16 << 20), 48 << 20)
    use_fused = (4 * slab_bytes + 4 * w_bytes + (2 << 20)) <= fused_budget
    if _force_two_pass:
        use_fused = False

    # ---- Fused single-pass: x read once, gated in place in VMEM -------------
    if use_fused:
        out = pl.pallas_call(
            functools.partial(_fused_se_kernel, inv_hw=1.0 / float(HW)),
            out_shape=jax.ShapeDtypeStruct((B, C, HW), x.dtype),
            grid_spec=pltpu.PrefetchScalarGridSpec(
                num_scalar_prefetch=0,
                grid=(B,),
                in_specs=[
                    pl.BlockSpec((1, C, HW), lambda b: (b, 0, 0)),
                    pl.BlockSpec((hidden, C), lambda b: (0, 0)),
                    pl.BlockSpec((C, hidden), lambda b: (0, 0)),
                ],
                out_specs=pl.BlockSpec((1, C, HW), lambda b: (b, 0, 0)),
            ),
            compiler_params=pltpu.CompilerParams(
                dimension_semantics=("parallel",),
                vmem_limit_bytes=_vmem_limit(4 * slab_bytes + 4 * w_bytes, vmem_cap),
            ),
            cost_estimate=pl.CostEstimate(
                flops=int(2 * B * C * HW + 4 * B * C * hidden),
                transcendentals=int(B * C),
                bytes_accessed=int(2 * B * C * HW * dsize + 2 * w_bytes),
            ),
        )(x, w1f, w2f)
        return out.reshape(B, C, H, W)

    # ---- Two-pass fallback for large slabs -----------------------------------
    thw, n_hw = _pick_hw_tile(C, HW, dsize, blk_target)
    if _thw_override is not None:
        assert _thw_override % _LANE == 0
        thw = int(_thw_override)
        n_hw = int(pl.cdiv(HW, thw))
    blk_bytes = C * thw * dsize
    acc_bytes = C * thw * 4

    # Pass 1: per-(b, c) channel sums.
    sums = pl.pallas_call(
        functools.partial(_sum_kernel, hw=HW, thw=thw, needs_mask=(HW % thw != 0)),
        out_shape=jax.ShapeDtypeStruct((B, C, 1), jnp.float32),
        grid_spec=pltpu.PrefetchScalarGridSpec(
            num_scalar_prefetch=0,
            grid=(B, n_hw),
            in_specs=[pl.BlockSpec((1, C, thw), lambda b, t: (b, 0, t))],
            out_specs=pl.BlockSpec((1, C, 1), lambda b, t: (b, 0, 0)),
            scratch_shapes=[pltpu.VMEM((C, thw), jnp.float32)],
        ),
        compiler_params=pltpu.CompilerParams(
            dimension_semantics=("parallel", "arbitrary"),
            vmem_limit_bytes=_vmem_limit(2 * blk_bytes + acc_bytes, vmem_cap),
        ),
        cost_estimate=pl.CostEstimate(
            flops=int(B * C * HW),
            transcendentals=0,
            bytes_accessed=int(B * C * HW * dsize + B * C * 4),
        ),
    )(x)

    # Excitation MLP + sigmoid: tiny, batched over B, done in XLA (keeps the
    # streaming kernels free of degenerate N=1 matmuls and weight buffers).
    z = sums[:, :, 0] * (1.0 / float(HW))                  # [B, C] true means
    h = jnp.maximum(z @ w1f.T, 0.0)                        # [B, hidden]
    att = jax.nn.sigmoid(h @ w2f.T)[:, :, None]            # [B, C, 1] f32

    # Pass 2: streaming gate, fully parallel.
    out = pl.pallas_call(
        _gate_kernel,
        out_shape=jax.ShapeDtypeStruct((B, C, HW), x.dtype),
        grid_spec=pltpu.PrefetchScalarGridSpec(
            num_scalar_prefetch=0,
            grid=(B, n_hw),
            in_specs=[
                pl.BlockSpec((1, C, 1), lambda b, t: (b, 0, 0)),
                pl.BlockSpec((1, C, thw), lambda b, t: (b, 0, t)),
            ],
            out_specs=pl.BlockSpec((1, C, thw), lambda b, t: (b, 0, t)),
        ),
        compiler_params=pltpu.CompilerParams(
            dimension_semantics=("parallel", "parallel"),
            vmem_limit_bytes=_vmem_limit(4 * blk_bytes, vmem_cap),
        ),
        cost_estimate=pl.CostEstimate(
            flops=int(B * C * HW),
            transcendentals=0,
            bytes_accessed=int(2 * B * C * HW * dsize + B * C * 4),
        ),
    )(att, x)

    return out.reshape(B, C, H, W)


# -----------------------------------------------------------------------------
# Reference + test
# -----------------------------------------------------------------------------
def _reference(x_nchw, w1, w2):
    z = jnp.mean(x_nchw, axis=(2, 3))                       # [B, C]
    h = jnp.maximum(z @ w1.T, 0.0)                          # [B, hidden]
    att = jax.nn.sigmoid(h @ w2.T)                          # [B, C]
    return x_nchw * att[:, :, None, None]


if __name__ == "__main__":
    # Small shapes consistent with the module: in_channels == out_channels == C.
    B, C = 2, 64
    squeeze_ratio, min_channels = 2, 32
    hidden = max(C // squeeze_ratio, min_channels)           # 32

    key = jax.random.PRNGKey(0)
    kx, k1, k2, kx2 = jax.random.split(key, 4)
    # PyTorch Linear layout: [out, in], no biases.
    w1 = 0.1 * jax.random.normal(k1, (hidden, C), dtype=jnp.float32)
    w2 = 0.1 * jax.random.normal(k2, (C, hidden), dtype=jnp.float32)

    # Case 1: fused single-pass path (slab fits VMEM).
    x = jax.random.normal(kx, (B, C, 16, 16), dtype=jnp.float32)
    ref = _reference(x, w1, w2)
    out = jax.block_until_ready(temporal_squeeze_excitation(x, w1, w2))
    assert jnp.allclose(out, ref, atol=1e-4, rtol=1e-4), "fused path mismatch"

    # Case 2: two-pass streaming path with a ragged HW tail (HW=324, tiles of 128),
    # exercising the in-kernel mask and partial-block output writes.
    x2 = jax.random.normal(kx2, (B, C, 18, 18), dtype=jnp.float32)
    ref2 = _reference(x2, w1, w2)
    out2 = jax.block_until_ready(
        temporal_squeeze_excitation(x2, w1, w2,
                                    _force_two_pass=True, _thw_override=128))
    assert jnp.allclose(out2, ref2, atol=1e-4, rtol=1e-4), "two-pass path mismatch"

    print("KERNEL_OK")
</pallas_src>

<mosaic_0001>
module attributes {stable_mosaic.version = 11 : i64} {
  func.func @_fused_se_kernel(%arg0: i32, %arg1: memref<1x64x256xf32, #tpu.memory_space<vmem>>, %arg2: memref<32x64xf32, #tpu.memory_space<vmem>>, %arg3: memref<64x32xf32, #tpu.memory_space<vmem>>, %arg4: memref<1x64x256xf32, #tpu.memory_space<vmem>>) attributes {dimension_semantics = [#tpu.dimension_semantics<parallel>], iteration_bounds = array<i64: 2>, scalar_prefetch = 0 : i64, scratch_operands = 0 : i64, tpu.core_type = #tpu.core_type<tc>, window_params = [{transform_indices = @transform_0, window_bounds = array<i64: 1, 64, 256>}, {pipeline_mode = #tpu.pipeline_mode<synchronous>, transform_indices = @transform_1, window_bounds = array<i64: 32, 64>}, {pipeline_mode = #tpu.pipeline_mode<synchronous>, transform_indices = @transform_2, window_bounds = array<i64: 64, 32>}, {transform_indices = @transform_3, window_bounds = array<i64: 1, 64, 256>}]} {
    %c0 = arith.constant 0 : index
    %c0_0 = arith.constant 0 : index
    %c0_1 = arith.constant 0 : index
    %0 = vector.load %arg1[%c0, %c0_0, %c0_1] : memref<1x64x256xf32, #tpu.memory_space<vmem>>, vector<1x64x256xf32>
    %1 = vector.shape_cast %0 : vector<1x64x256xf32> to vector<64x256xf32>
    %cst = arith.constant dense<0.000000e+00> : vector<64xf32>
    %2 = vector.multi_reduction <add>, %1, %cst [1] : vector<64x256xf32> to vector<64xf32>
    %3 = vector.shape_cast %2 : vector<64xf32> to vector<64x1xf32>
    %cst_2 = arith.constant 3.906250e-03 : f32
    %4 = vector.broadcast %cst_2 : f32 to vector<64x1xf32>
    %5 = arith.mulf %3, %4 : vector<64x1xf32>
    %c0_3 = arith.constant 0 : index
    %c0_4 = arith.constant 0 : index
    %6 = vector.load %arg2[%c0_3, %c0_4] : memref<32x64xf32, #tpu.memory_space<vmem>>, vector<32x64xf32>
    %cst_5 = arith.constant dense<0.000000e+00> : vector<32x1xf32>
    %7 = tpu.matmul %6, %5, %cst_5 {dimension_numbers = #tpu.dot_dimension_numbers<[1], [0], [0], [1], [0, 0, 1, 1], [], []>} : vector<32x64xf32>, vector<64x1xf32>, vector<32x1xf32> -> vector<32x1xf32>
    %cst_6 = arith.constant 0.000000e+00 : f32
    %8 = vector.broadcast %cst_6 : f32 to vector<32x1xf32>
    %9 = arith.maximumf %7, %8 : vector<32x1xf32>
    %c0_7 = arith.constant 0 : index
    %c0_8 = arith.constant 0 : index
    %10 = vector.load %arg3[%c0_7, %c0_8] : memref<64x32xf32, #tpu.memory_space<vmem>>, vector<64x32xf32>
    %cst_9 = arith.constant dense<0.000000e+00> : vector<64x1xf32>
    %11 = tpu.matmul %10, %9, %cst_9 {dimension_numbers = #tpu.dot_dimension_numbers<[1], [0], [0], [1], [0, 0, 1, 1], [], []>} : vector<64x32xf32>, vector<32x1xf32>, vector<64x1xf32> -> vector<64x1xf32>
    %12 = arith.negf %11 : vector<64x1xf32>
    %13 = math.exp %12 : vector<64x1xf32>
    %cst_10 = arith.constant 1.000000e+00 : f32
    %14 = vector.broadcast %cst_10 : f32 to vector<64x1xf32>
    %15 = arith.addf %14, %13 : vector<64x1xf32>
    %16 = arith.divf %14, %15 : vector<64x1xf32>
    %17 = vector.broadcast %16 : vector<64x1xf32> to vector<64x256xf32>
    %18 = arith.mulf %1, %17 : vector<64x256xf32>
    %c0_11 = arith.constant 0 : index
    %c0_12 = arith.constant 0 : index
    %c0_13 = arith.constant 0 : index
    %19 = vector.load %arg4[%c0_11, %c0_12, %c0_13] : memref<1x64x256xf32, #tpu.memory_space<vmem>>, vector<1x64x256xf32>
    %20 = vector.shape_cast %19 : vector<1x64x256xf32> to vector<64x256xf32>
    %21 = vector.shape_cast %18 : vector<64x256xf32> to vector<1x64x256xf32>
    tpu.vector_store %arg4[%c0_11, %c0_12, %c0_13], %21 {strides = array<i32>} : memref<1x64x256xf32, #tpu.memory_space<vmem>>, vector<1x64x256xf32>,
    return
  }
  func.func @transform_0(%arg0: i32) -> (i32, i32, i32) {
    %c0_i32 = arith.constant 0 : i32
    %c0_i32_0 = arith.constant 0 : i32
    %c0_i32_1 = arith.constant 0 : i32
    return %arg0, %c0_i32, %c0_i32_0 : i32, i32, i32
  }
  func.func @transform_1(%arg0: i32) -> (i32, i32) {
    %c0_i32 = arith.constant 0 : i32
    %c0_i32_0 = arith.constant 0 : i32
    %c0_i32_1 = arith.constant 0 : i32
    return %c0_i32, %c0_i32_0 : i32, i32
  }
  func.func @transform_2(%arg0: i32) -> (i32, i32) {
    %c0_i32 = arith.constant 0 : i32
    %c0_i32_0 = arith.constant 0 : i32
    %c0_i32_1 = arith.constant 0 : i32
    return %c0_i32, %c0_i32_0 : i32, i32
  }
  func.func @transform_3(%arg0: i32) -> (i32, i32, i32) {
    %c0_i32 = arith.constant 0 : i32
    %c0_i32_0 = arith.constant 0 : i32
    %c0_i32_1 = arith.constant 0 : i32
    return %arg0, %c0_i32, %c0_i32_0 : i32, i32, i32
  }
}

</mosaic_0001>

<llo_original>
// kernel: tpu_custom_call.1
$region0: #{tpu_custom_call.1}
  #allocation0 [shape = 'u32[]', space=smem, size = 0x4, offset = 0x4, fixed_abs, tag = 'smem constant byte address 0x4 - core index']
  #allocation1 [shape = 'u32[72,128]{1,0:T(1,128)}', space=vmem, size = 0x9000, scoped, tag = 'internal scratch']
  %s0 = inlined_call_operand.hbm [shape: f32[2,64,256], index: 0, kind: input, shape index: {}]
  %s1 = inlined_call_operand.vmem [shape: f32[32,64], index: 1, kind: input, shape index: {}]
  %s2 = inlined_call_operand.vmem [shape: f32[64,32], index: 2, kind: input, shape index: {}]
  %s3 = inlined_call_operand.hbm [shape: f32[2,64,256], index: 3, kind: output, shape index: {}]
  %s4 = sld [smem:[#allocation0]]
  $region49: #{tpu_custom_call.1} parent=0
    _
  %s6 = ssub.s32 1, %s4
  %s7 = scalar_select 0, %s6, %s4
  $region1: #{tpu_custom_call.1} parent=0
    #allocation2 [shape = 'u8[131072]{0}', space=vmem, size = 0x20000, scoped, tag = 'input window, operand 0']
    #allocation3 [shape = 's32[2]{0}', space=sflag, size = 0x8, scoped, tag = 'scoped memory for tpu_custom_call.1']
    #allocation4 [shape = 's32[2]{0}', space=sflag, size = 0x8, scoped, tag = 'scoped memory for tpu_custom_call.1']
    #allocation5 [shape = 'u8[131072]{0}', space=vmem, size = 0x20000, scoped, tag = 'output window, operand 0']
    %8 = vsyncpa [#allocation3], 0
    %s9 = scalar_lea.sflag [#allocation3], 1
    %10 = vsyncpa %s9, 0
    %11 = vsyncpa [#allocation4], 0
    %s12 = scalar_lea.sflag [#allocation4], 1
    %13 = vsyncpa %s12, 0
    loop: start=0, step=1, limit=4
    $region2: #{tpu_custom_call.1} parent=1 // loop_pre_header
      _
    $region3: #{tpu_custom_call.1} parent=1 // loop_header
      %s15 = sphi 0, %s19
      %p16 = scmp.ge.s32.totalorder %s15, 4
      %s25 = sphi 0, %s27
      %s28 = sphi 0, %s25
      %s29 = sphi 0, %s28
      %s45 = sphi 0, %s29
      %s49 = sphi 0, %s49
      %s51 = sphi 0, %s49
      %s52 = sphi 0, %s51
      %s66 = sphi 0, %s52
      %s70 = sphi 0, %s70
      %s72 = sphi 0, %s70
      %s73 = sphi 0, %s72
      %s87 = sphi 0, %s73
      %s93 = sphi 0, %s95
      %s96 = sphi 0, %s93
      %s97 = sphi 0, %s96
      %s113 = sphi 0, %s97
    $region4: #{tpu_custom_call.1} parent=1 // loop_header_branch
      %18 = sbr.rel (%p16) target = $region8
    $region5: #{tpu_custom_call.1} parent=1 // loop_body
      %s20 = ssub.s32 %s15, 1
      %s21 = ssub.s32 %s15, 2
      %s22 = sadd.s32 %s15, 1
      %s23 = ssub.s32 %s15, %s22
      %p24 = scmp.eq.s32.totalorder %s23, 0
      %s26 = sadd.s32 %s25, 1
      %s27 = scalar_select %p24, %s25, %s26
      %p30 = pneg %p24
      %p31 = scmp.eq.s32.totalorder %s15, 1
      %p32 = por %p30, %p31
      %p33 = scmp.ne.s32.totalorder %s25, %s28
      %p34 = scmp.eq.s32.totalorder %s15, 0
      %p35 = por %p33, %p34
      %p36 = scmp.ne.s32.totalorder %s25, %s28
      %p37 = scmp.eq.s32.totalorder %s20, 1
      %p38 = por %p36, %p37
      %p39 = scmp.ne.s32.totalorder %s28, %s29
      %p40 = scmp.eq.s32.totalorder %s20, 0
      %p41 = por %p39, %p40
      %p42 = scmp.ne.s32.totalorder %s28, %s29
      %p43 = scmp.eq.s32.totalorder %s21, 1
      %p44 = por %p42, %p43
      %p46 = scmp.ne.s32.totalorder %s29, %s45
      %p47 = scmp.eq.s32.totalorder %s21, 0
      %p48 = por %p46, %p47
      %s50 = sadd.s32 %s49, 1
      %p53 = scmp.eq.s32.totalorder %s15, 1
      %p54 = scmp.ne.s32.totalorder %s49, %s51
      %p55 = scmp.eq.s32.totalorder %s15, 0
      %p56 = por %p54, %p55
      %p57 = scmp.ne.s32.totalorder %s49, %s51
      %p58 = scmp.eq.s32.totalorder %s20, 1
      %p59 = por %p57, %p58
      %p60 = scmp.ne.s32.totalorder %s51, %s52
      %p61 = scmp.eq.s32.totalorder %s20, 0
      %p62 = por %p60, %p61
      %p63 = scmp.ne.s32.totalorder %s51, %s52
      %p64 = scmp.eq.s32.totalorder %s21, 1
      %p65 = por %p63, %p64
      %p67 = scmp.ne.s32.totalorder %s52, %s66
      %p68 = scmp.eq.s32.totalorder %s21, 0
      %p69 = por %p67, %p68
      %s71 = sadd.s32 %s70, 1
      %p74 = scmp.eq.s32.totalorder %s15, 1
      %p75 = scmp.ne.s32.totalorder %s70, %s72
      %p76 = scmp.eq.s32.totalorder %s15, 0
      %p77 = por %p75, %p76
      %p78 = scmp.ne.s32.totalorder %s70, %s72
      %p79 = scmp.eq.s32.totalorder %s20, 1
      %p80 = por %p78, %p79
      %p81 = scmp.ne.s32.totalorder %s72, %s73
      %p82 = scmp.eq.s32.totalorder %s20, 0
      %p83 = por %p81, %p82
      %p84 = scmp.ne.s32.totalorder %s72, %s73
      %p85 = scmp.eq.s32.totalorder %s21, 1
      %p86 = por %p84, %p85
      %p88 = scmp.ne.s32.totalorder %s73, %s87
      %p89 = scmp.eq.s32.totalorder %s21, 0
      %p90 = por %p88, %p89
      %s91 = ssub.s32 %s15, %s22
      %p92 = scmp.eq.s32.totalorder %s91, 0
      %s94 = sadd.s32 %s93, 1
      %s95 = scalar_select %p92, %s93, %s94
      %p98 = pneg %p92
      %p99 = scmp.eq.s32.totalorder %s15, 1
      %p100 = por %p98, %p99
      %p101 = scmp.ne.s32.totalorder %s93, %s96
      %p102 = scmp.eq.s32.totalorder %s15, 0
      %p103 = por %p101, %p102
      %p104 = scmp.ne.s32.totalorder %s93, %s96
      %p105 = scmp.eq.s32.totalorder %s20, 1
      %p106 = por %p104, %p105
      %p107 = scmp.ne.s32.totalorder %s96, %s97
      %p108 = scmp.eq.s32.totalorder %s20, 0
      %p109 = por %p107, %p108
      %p110 = scmp.ne.s32.totalorder %s96, %s97
      %p111 = scmp.eq.s32.totalorder %s21, 1
      %p112 = por %p110, %p111
      %p114 = scmp.ne.s32.totalorder %s97, %s113
      %p115 = scmp.eq.s32.totalorder %s21, 0
      %p116 = por %p114, %p115
      %p117 = scmp.le.s32.totalorder 1, %s15
      %p118 = scmp.lt.s32.totalorder %s15, 3
      %p119 = pnand %p117, %p118
      %p120 = pneg %p119
      // Predicated region
      $region9: #{tpu_custom_call.1} parent=5 // pred_check
        _
      $region10: #{tpu_custom_call.1} parent=5 // pred_check_branch
        %122 = sbr.rel (%p119) target = $region12
      $region11: #{tpu_custom_call.1} parent=5 // pred_region
        %s123 = ssub.s32 %s15, 1
        // Predicated region
        $region13: #{tpu_custom_call.1} parent=11 // pred_check
          %p124 = pneg %p62
        $region14: #{tpu_custom_call.1} parent=11 // pred_check_branch
          %126 = sbr.rel (%p124) target = $region16
        $region15: #{tpu_custom_call.1} parent=11 // pred_region
          _
        $region16: #{tpu_custom_call.1} parent=11 // pred_fallthru
          _
        // Predicated region
        $region17: #{tpu_custom_call.1} parent=11 // pred_check
          %p127 = pneg %p83
        $region18: #{tpu_custom_call.1} parent=11 // pred_check_branch
          %129 = sbr.rel (%p127) target = $region20
        $region19: #{tpu_custom_call.1} parent=11 // pred_region
          _
        $region20: #{tpu_custom_call.1} parent=11 // pred_fallthru
          _
      $region12: #{tpu_custom_call.1} parent=5 // pred_fallthru
        _
      %p130 = scmp.lt.s32.totalorder %s15, 2
      // Predicated region
      $region21: #{tpu_custom_call.1} parent=5 // pred_check
        %p131 = pneg %p130
      $region22: #{tpu_custom_call.1} parent=5 // pred_check_branch
        %133 = sbr.rel (%p131) target = $region24
      $region23: #{tpu_custom_call.1} parent=5 // pred_region
        // Predicated region
        $region25: #{tpu_custom_call.1} parent=23 // pred_check
          %p134 = pneg %p35
        $region26: #{tpu_custom_call.1} parent=23 // pred_check_branch
          %136 = sbr.rel (%p134) target = $region28
        $region27: #{tpu_custom_call.1} parent=23 // pred_region
          %s137 = sand.u32 %s25, 1
          %s138 = scalar_lea.sflag [#allocation3], %s137
          %s139 = sand.u32 %s25, 1
          %s140 = smul.addr %s139, 128
          %s141 = scalar_lea.vmem [#allocation2], %s140
          %143 = vsyncadd %s138, 0
          %s144 = smul.addr %s15, 16
          %s145 = smul.addr %s144, 8
          %s146 = scalar_lea.hbm %s0, %s145
          %s147 = sshll.u32 %s146, 4
          %s148 = int_to_ptr.hbm [resolvable:$true] %s147
          %s149 = sshll.u32 %s141, 4
          %s150 = int_to_ptr.vmem [resolvable:$true] %s149
          %155 = dma.hbm_to_vmem [thread:$0]  %s148, 2048, %s150, %s138, 256, 256, 16
        $region28: #{tpu_custom_call.1} parent=23 // pred_fallthru
          _
      $region24: #{tpu_custom_call.1} parent=5 // pred_fallthru
        _
      %p156 = scmp.le.s32.totalorder 1, %s15
      %p157 = scmp.lt.s32.totalorder %s15, 3
      %p158 = pnand %p156, %p157
      %p159 = pneg %p158
      // Predicated region
      $region29: #{tpu_custom_call.1} parent=5 // pred_check
        _
      $region30: #{tpu_custom_call.1} parent=5 // pred_check_branch
        %161 = sbr.rel (%p158) target = $region32
      $region31: #{tpu_custom_call.1} parent=5 // pred_region
        %s162 = ssub.s32 %s15, 1
        %s163 = sand.u32 %s28, 1
        %s164 = scalar_lea.sflag [#allocation3], %s163
        %s165 = sand.u32 %s28, 1
        %s166 = smul.addr %s165, 128
        %s167 = scalar_lea.vmem [#allocation2], %s166
        // Predicated region
        $region33: #{tpu_custom_call.1} parent=31 // pred_check
          %p168 = pneg %p41
        $region34: #{tpu_custom_call.1} parent=31 // pred_check_branch
          %170 = sbr.rel (%p168) target = $region36
        $region35: #{tpu_custom_call.1} parent=31 // pred_region
          %172 = dma.done %s164, 2048
        $region36: #{tpu_custom_call.1} parent=31 // pred_fallthru
          _
        %s173 = sand.u32 %s28, 1
        %s174 = scalar_lea.sflag [#allocation3], %s173
        %s175 = sand.u32 %s28, 1
        %s176 = smul.addr %s175, 128
        %s177 = scalar_lea.vmem [#allocation2], %s176
        %p178 = pneg %p41
        %p179 = pneg %p38
        %p180 = pneg %p62
        %p181 = pneg %p59
        %p182 = pneg %p83
        %p183 = pneg %p80
        %p184 = pneg %p109
        %p185 = pneg %p106
        %s186 = sand.u32 %s96, 1
        %s187 = scalar_lea.sflag [#allocation4], %s186
        %s188 = sand.u32 %s96, 1
        %s189 = smul.addr %s188, 128
        %s190 = scalar_lea.vmem [#allocation5], %s189
        %v191 = vld [vmem:[%s167] sm:$0xff]
        %v192 = vld [vmem:[%s167 + $0x8] sm:$0xff]
        %v193 = vld [vmem:[%s167 + $0x10] sm:$0xff]
        %v194 = vld [vmem:[%s167 + $0x18] sm:$0xff]
        %v195 = vld [vmem:[%s167 + $0x20] sm:$0xff]
        %v196 = vld [vmem:[%s167 + $0x28] sm:$0xff]
        %v197 = vld [vmem:[%s167 + $0x30] sm:$0xff]
        %v198 = vld [vmem:[%s167 + $0x38] sm:$0xff]
        %v199 = vld [vmem:[%s167 + $0x40] sm:$0xff]
        %v200 = vld [vmem:[%s167 + $0x48] sm:$0xff]
        %v201 = vld [vmem:[%s167 + $0x50] sm:$0xff]
        %v202 = vld [vmem:[%s167 + $0x58] sm:$0xff]
        %v203 = vld [vmem:[%s167 + $0x60] sm:$0xff]
        %v204 = vld [vmem:[%s167 + $0x68] sm:$0xff]
        %v205 = vld [vmem:[%s167 + $0x70] sm:$0xff]
        %v206 = vld [vmem:[%s167 + $0x78] sm:$0xff]
        %v207 = vadd.f32 %v191, %v192
        %208 = vadd.xlane.f32.xlu0 %v207
        %v209 = vpop.xlane.xlu0 %208
        %v210 = vadd.f32 %v193, %v194
        %211 = vadd.xlane.f32.xlu0 %v210
        %v212 = vpop.xlane.xlu0 %211
        %v213 = vadd.f32 %v195, %v196
        %214 = vadd.xlane.f32.xlu0 %v213
        %v215 = vpop.xlane.xlu0 %214
        %v216 = vadd.f32 %v197, %v198
        %217 = vadd.xlane.f32.xlu0 %v216
        %v218 = vpop.xlane.xlu0 %217
        %v219 = vadd.f32 %v199, %v200
        %220 = vadd.xlane.f32.xlu0 %v219
        %v221 = vpop.xlane.xlu0 %220
        %v222 = vadd.f32 %v201, %v202
        %223 = vadd.xlane.f32.xlu0 %v222
        %v224 = vpop.xlane.xlu0 %223
        %v225 = vadd.f32 %v203, %v204
        %226 = vadd.xlane.f32.xlu0 %v225
        %v227 = vpop.xlane.xlu0 %226
        %v228 = vadd.f32 %v205, %v206
        %229 = vadd.xlane.f32.xlu0 %v228
        %v230 = vpop.xlane.xlu0 %229
        %v231 = vmul.f32 %v209, 0.00390625
        %v232 = vmul.f32 %v212, 0.00390625
        %v233 = vmul.f32 %v215, 0.00390625
        %v234 = vmul.f32 %v218, 0.00390625
        %v235 = vmul.f32 %v221, 0.00390625
        %v236 = vmul.f32 %v224, 0.00390625
        %v237 = vmul.f32 %v227, 0.00390625
        %v238 = vmul.f32 %v230, 0.00390625
        %v239 = vld [vmem:[%s1] sm:$0xff]
        %v240 = vld [vmem:[%s1 + $0x8] sm:$0xff]
        %v241 = vld [vmem:[%s1 + $0x10] sm:$0xff]
        %v242 = vld [vmem:[%s1 + $0x18] sm:$0xff]
        %vm243 = vcmask 523264
        %v245 = vsel %vm243, %v239, 0
        %v248 = vsel %vm243, %v240, 0
        %v251 = vsel %vm243, %v241, 0
        %v254 = vsel %vm243, %v242, 0
        %256 = vmatpush.msra.mxu0 0.0
        %257 = vmatpush.msra.mxu0 0.0
        %258 = vmatpush.msra.mxu0 0.0
        %259 = vmatpush.msra.mxu0 0.0
        %260 = vmatpush.msra.mxu0 0.0
        %261 = vmatpush.msra.mxu0 0.0
        %262 = vmatpush.msra.mxu0 0.0
        %263 = vmatpush.msra.mxu0 0.0
        %264 = vmatpush.msra.mxu0 %v238
        %265 = vmatpush.msra.mxu0 %v237
        %266 = vmatpush.msra.mxu0 %v236
        %267 = vmatpush.msra.mxu0 %v235
        %268 = vmatpush.msra.mxu0 %v234
        %269 = vmatpush.msra.mxu0 %v233
        %270 = vmatpush.msra.mxu0 %v232
        %271 = vmatpush.msra.mxu0 %v231
        %272 = vmatmul.f32.gmra.mxu0 %v245
        %v273 = vpop.f32.mrf.mxu0
        %v274 = vadd.f32 0.0, %v273
        %275 = vmatmul.f32.gmra.mxu0 %v248
        %v276 = vpop.f32.mrf.mxu0
        %v277 = vadd.f32 0.0, %v276
        %278 = vmatmul.f32.gmra.mxu0 %v251
        %v279 = vpop.f32.mrf.mxu0
        %v280 = vadd.f32 0.0, %v279
        %281 = vmatmul.f32.gmra.mxu0 %v254
        %v282 = vpop.f32.mrf.mxu0
        %v283 = vadd.f32 0.0, %v282
        %284 = vdwg.mxu0
        %v285 = vmax.f32 %v274, 0.0
        %v286 = vmax.f32 %v277, 0.0
        %v287 = vmax.f32 %v280, 0.0
        %v288 = vmax.f32 %v283, 0.0
        %v289 = vld [vmem:[%s2] sm:$0xff]
        %v290 = vld [vmem:[%s2 + $0x8] sm:$0xff]
        %v291 = vld [vmem:[%s2 + $0x10] sm:$0xff]
        %v292 = vld [vmem:[%s2 + $0x18] sm:$0xff]
        %v293 = vld [vmem:[%s2 + $0x20] sm:$0xff]
        %v294 = vld [vmem:[%s2 + $0x28] sm:$0xff]
        %v295 = vld [vmem:[%s2 + $0x30] sm:$0xff]
        %v296 = vld [vmem:[%s2 + $0x38] sm:$0xff]
        %vm297 = vcmask 261120
        %v299 = vsel %vm297, %v289, 0
        %v302 = vsel %vm297, %v290, 0
        %v305 = vsel %vm297, %v291, 0
        %v308 = vsel %vm297, %v292, 0
        %v311 = vsel %vm297, %v293, 0
        %v314 = vsel %vm297, %v294, 0
        %v317 = vsel %vm297, %v295, 0
        %v320 = vsel %vm297, %v296, 0
        %322 = vmatpush.msra.mxu0 0.0
        %323 = vmatpush.msra.mxu0 0.0
        %324 = vmatpush.msra.mxu0 0.0
        %325 = vmatpush.msra.mxu0 0.0
        %326 = vmatpush.msra.mxu0 0.0
        %327 = vmatpush.msra.mxu0 0.0
        %328 = vmatpush.msra.mxu0 0.0
        %329 = vmatpush.msra.mxu0 0.0
        %330 = vmatpush.msra.mxu0 0.0
        %331 = vmatpush.msra.mxu0 0.0
        %332 = vmatpush.msra.mxu0 0.0
        %333 = vmatpush.msra.mxu0 0.0
        %334 = vmatpush.msra.mxu0 %v288
        %335 = vmatpush.msra.mxu0 %v287
        %336 = vmatpush.msra.mxu0 %v286
        %337 = vmatpush.msra.mxu0 %v285
        %338 = vmatmul.f32.gmra.mxu0 %v299
        %v339 = vpop.f32.mrf.mxu0
        %v340 = vadd.f32 0.0, %v339
        %341 = vmatmul.f32.gmra.mxu0 %v302
        %v342 = vpop.f32.mrf.mxu0
        %v343 = vadd.f32 0.0, %v342
        %344 = vmatmul.f32.gmra.mxu0 %v305
        %v345 = vpop.f32.mrf.mxu0
        %v346 = vadd.f32 0.0, %v345
        %347 = vmatmul.f32.gmra.mxu0 %v308
        %v348 = vpop.f32.mrf.mxu0
        %v349 = vadd.f32 0.0, %v348
        %350 = vmatmul.f32.gmra.mxu0 %v311
        %v351 = vpop.f32.mrf.mxu0
        %v352 = vadd.f32 0.0, %v351
        %353 = vmatmul.f32.gmra.mxu0 %v314
        %v354 = vpop.f32.mrf.mxu0
        %v355 = vadd.f32 0.0, %v354
        %356 = vmatmul.f32.gmra.mxu0 %v317
        %v357 = vpop.f32.mrf.mxu0
        %v358 = vadd.f32 0.0, %v357
        %359 = vmatmul.f32.gmra.mxu0 %v320
        %v360 = vpop.f32.mrf.mxu0
        %v361 = vadd.f32 0.0, %v360
        %362 = vdwg.mxu0
        %v363 = vxor.u32 %v340, 2147483648
        %v364 = vxor.u32 %v343, 2147483648
        %v365 = vxor.u32 %v346, 2147483648
        %v366 = vxor.u32 %v349, 2147483648
        %v367 = vxor.u32 %v352, 2147483648
        %v368 = vxor.u32 %v355, 2147483648
        %v369 = vxor.u32 %v358, 2147483648
        %v370 = vxor.u32 %v361, 2147483648
        %v371 = vmul.f32 %v363, 1.442695
        %v372 = vpow.pop %v371
        %v373 = vmul.f32 %v364, 1.442695
        %v374 = vpow.pop %v373
        %v375 = vmul.f32 %v365, 1.442695
        %v376 = vpow.pop %v375
        %v377 = vmul.f32 %v366, 1.442695
        %v378 = vpow.pop %v377
        %v379 = vmul.f32 %v367, 1.442695
        %v380 = vpow.pop %v379
        %v381 = vmul.f32 %v368, 1.442695
        %v382 = vpow.pop %v381
        %v383 = vmul.f32 %v369, 1.442695
        %v384 = vpow.pop %v383
        %v385 = vmul.f32 %v370, 1.442695
        %v386 = vpow.pop %v385
        %v387 = vadd.f32 %v372, 1.0
        %v388 = vadd.f32 %v374, 1.0
        %v389 = vadd.f32 %v376, 1.0
        %v390 = vadd.f32 %v378, 1.0
        %v391 = vadd.f32 %v380, 1.0
        %v392 = vadd.f32 %v382, 1.0
        %v393 = vadd.f32 %v384, 1.0
        %v394 = vadd.f32 %v386, 1.0
        %v395 = vrcp.pop %v387
        %v396 = vmul.f32 %v387, %v395
        %v397 = vsub.f32 1.0, %v396
        %v398 = vmul.f32 %v395, %v397
        %v399 = vadd.f32 %v395, %v398
        %vm400 = vweird.f32 %v387
        %vm401 = vweird.f32 %v395
        %vm402 = vmor %vm400, %vm401
        %v403 = vsel %vm402, %v395, %v399
        %v404 = vand.u32 2147483647, %v387
        %vm405 = vcmp.eq.f32.partialorder %v404, 8.507059e+37
        %v406 = vand.u32 %v387, 2147483648
        %v407 = vor.u32 1.1754944e-38, %v406
        %v408 = vsel %vm405, %v407, %v403
        %v409 = vmul.f32 1.0, %v408
        %v410 = vrcp.pop %v388
        %v411 = vmul.f32 %v388, %v410
        %v412 = vsub.f32 1.0, %v411
        %v413 = vmul.f32 %v410, %v412
        %v414 = vadd.f32 %v410, %v413
        %vm415 = vweird.f32 %v388
        %vm416 = vweird.f32 %v410
        %vm417 = vmor %vm415, %vm416
        %v418 = vsel %vm417, %v410, %v414
        %v419 = vand.u32 2147483647, %v388
        %vm420 = vcmp.eq.f32.partialorder %v419, 8.507059e+37
        %v421 = vand.u32 %v388, 2147483648
        %v422 = vor.u32 1.1754944e-38, %v421
        %v423 = vsel %vm420, %v422, %v418
        %v424 = vmul.f32 1.0, %v423
        %v425 = vrcp.pop %v389
        %v426 = vmul.f32 %v389, %v425
        %v427 = vsub.f32 1.0, %v426
        %v428 = vmul.f32 %v425, %v427
        %v429 = vadd.f32 %v425, %v428
        %vm430 = vweird.f32 %v389
        %vm431 = vweird.f32 %v425
        %vm432 = vmor %vm430, %vm431
        %v433 = vsel %vm432, %v425, %v429
        %v434 = vand.u32 2147483647, %v389
        %vm435 = vcmp.eq.f32.partialorder %v434, 8.507059e+37
        %v436 = vand.u32 %v389, 2147483648
        %v437 = vor.u32 1.1754944e-38, %v436
        %v438 = vsel %vm435, %v437, %v433
        %v439 = vmul.f32 1.0, %v438
        %v440 = vrcp.pop %v390
        %v441 = vmul.f32 %v390, %v440
        %v442 = vsub.f32 1.0, %v441
        %v443 = vmul.f32 %v440, %v442
        %v444 = vadd.f32 %v440, %v443
        %vm445 = vweird.f32 %v390
        %vm446 = vweird.f32 %v440
        %vm447 = vmor %vm445, %vm446
        %v448 = vsel %vm447, %v440, %v444
        %v449 = vand.u32 2147483647, %v390
        %vm450 = vcmp.eq.f32.partialorder %v449, 8.507059e+37
        %v451 = vand.u32 %v390, 2147483648
        %v452 = vor.u32 1.1754944e-38, %v451
        %v453 = vsel %vm450, %v452, %v448
        %v454 = vmul.f32 1.0, %v453
        %v455 = vrcp.pop %v391
        %v456 = vmul.f32 %v391, %v455
        %v457 = vsub.f32 1.0, %v456
        %v458 = vmul.f32 %v455, %v457
        %v459 = vadd.f32 %v455, %v458
        %vm460 = vweird.f32 %v391
        %vm461 = vweird.f32 %v455
        %vm462 = vmor %vm460, %vm461
        %v463 = vsel %vm462, %v455, %v459
        %v464 = vand.u32 2147483647, %v391
        %vm465 = vcmp.eq.f32.partialorder %v464, 8.507059e+37
        %v466 = vand.u32 %v391, 2147483648
        %v467 = vor.u32 1.1754944e-38, %v466
        %v468 = vsel %vm465, %v467, %v463
        %v469 = vmul.f32 1.0, %v468
        %v470 = vrcp.pop %v392
        %v471 = vmul.f32 %v392, %v470
        %v472 = vsub.f32 1.0, %v471
        %v473 = vmul.f32 %v470, %v472
        %v474 = vadd.f32 %v470, %v473
        %vm475 = vweird.f32 %v392
        %vm476 = vweird.f32 %v470
        %vm477 = vmor %vm475, %vm476
        %v478 = vsel %vm477, %v470, %v474
        %v479 = vand.u32 2147483647, %v392
        %vm480 = vcmp.eq.f32.partialorder %v479, 8.507059e+37
        %v481 = vand.u32 %v392, 2147483648
        %v482 = vor.u32 1.1754944e-38, %v481
        %v483 = vsel %vm480, %v482, %v478
        %v484 = vmul.f32 1.0, %v483
        %v485 = vrcp.pop %v393
        %v486 = vmul.f32 %v393, %v485
        %v487 = vsub.f32 1.0, %v486
        %v488 = vmul.f32 %v485, %v487
        %v489 = vadd.f32 %v485, %v488
        %vm490 = vweird.f32 %v393
        %vm491 = vweird.f32 %v485
        %vm492 = vmor %vm490, %vm491
        %v493 = vsel %vm492, %v485, %v489
        %v494 = vand.u32 2147483647, %v393
        %vm495 = vcmp.eq.f32.partialorder %v494, 8.507059e+37
        %v496 = vand.u32 %v393, 2147483648
        %v497 = vor.u32 1.1754944e-38, %v496
        %v498 = vsel %vm495, %v497, %v493
        %v499 = vmul.f32 1.0, %v498
        %v500 = vrcp.pop %v394
        %v501 = vmul.f32 %v394, %v500
        %v502 = vsub.f32 1.0, %v501
        %v503 = vmul.f32 %v500, %v502
        %v504 = vadd.f32 %v500, %v503
        %vm505 = vweird.f32 %v394
        %vm506 = vweird.f32 %v500
        %vm507 = vmor %vm505, %vm506
        %v508 = vsel %vm507, %v500, %v504
        %v509 = vand.u32 2147483647, %v394
        %vm510 = vcmp.eq.f32.partialorder %v509, 8.507059e+37
        %v511 = vand.u32 %v394, 2147483648
        %v512 = vor.u32 1.1754944e-38, %v511
        %v513 = vsel %vm510, %v512, %v508
        %v514 = vmul.f32 1.0, %v513
        %516 = vset.pattern.permute.xlu0 0
        %517 = vperm.xlu0 %516, %v409
        %v518 = vpop.permute.xlu0 %517
        %521 = vset.pattern.permute.xlu0 0
        %522 = vperm.xlu0 %521, %v424
        %v523 = vpop.permute.xlu0 %522
        %526 = vset.pattern.permute.xlu0 0
        %527 = vperm.xlu0 %526, %v439
        %v528 = vpop.permute.xlu0 %527
        %531 = vset.pattern.permute.xlu0 0
        %532 = vperm.xlu0 %531, %v454
        %v533 = vpop.permute.xlu0 %532
        %536 = vset.pattern.permute.xlu0 0
        %537 = vperm.xlu0 %536, %v469
        %v538 = vpop.permute.xlu0 %537
        %541 = vset.pattern.permute.xlu0 0
        %542 = vperm.xlu0 %541, %v484
        %v543 = vpop.permute.xlu0 %542
        %546 = vset.pattern.permute.xlu0 0
        %547 = vperm.xlu0 %546, %v499
        %v548 = vpop.permute.xlu0 %547
        %551 = vset.pattern.permute.xlu0 0
        %552 = vperm.xlu0 %551, %v514
        %v553 = vpop.permute.xlu0 %552
        %v555 = vmul.f32 %v191, %v518
        %v556 = vmul.f32 %v192, %v518
        %v557 = vmul.f32 %v193, %v523
        %v558 = vmul.f32 %v194, %v523
        %v559 = vmul.f32 %v195, %v528
        %v560 = vmul.f32 %v196, %v528
        %v561 = vmul.f32 %v197, %v533
        %v562 = vmul.f32 %v198, %v533
        %v563 = vmul.f32 %v199, %v538
        %v564 = vmul.f32 %v200, %v538
        %v565 = vmul.f32 %v201, %v543
        %v566 = vmul.f32 %v202, %v543
        %v567 = vmul.f32 %v203, %v548
        %v568 = vmul.f32 %v204, %v548
        %v569 = vmul.f32 %v205, %v553
        %v570 = vmul.f32 %v206, %v553
        %571 = vst [vmem:[%s190] sm:$0xff] %v555
        %572 = vst [vmem:[%s190 + $0x8] sm:$0xff] %v556
        %573 = vst [vmem:[%s190 + $0x10] sm:$0xff] %v557
        %574 = vst [vmem:[%s190 + $0x18] sm:$0xff] %v558
        %575 = vst [vmem:[%s190 + $0x20] sm:$0xff] %v559
        %576 = vst [vmem:[%s190 + $0x28] sm:$0xff] %v560
        %577 = vst [vmem:[%s190 + $0x30] sm:$0xff] %v561
        %578 = vst [vmem:[%s190 + $0x38] sm:$0xff] %v562
        %579 = vst [vmem:[%s190 + $0x40] sm:$0xff] %v563
        %580 = vst [vmem:[%s190 + $0x48] sm:$0xff] %v564
        %581 = vst [vmem:[%s190 + $0x50] sm:$0xff] %v565
        %582 = vst [vmem:[%s190 + $0x58] sm:$0xff] %v566
        %583 = vst [vmem:[%s190 + $0x60] sm:$0xff] %v567
        %584 = vst [vmem:[%s190 + $0x68] sm:$0xff] %v568
        %585 = vst [vmem:[%s190 + $0x70] sm:$0xff] %v569
        %586 = vst [vmem:[%s190 + $0x78] sm:$0xff] %v570
        %s587 = sand.u32 %s96, 1
        %s588 = scalar_lea.sflag [#allocation4], %s587
        %s589 = sand.u32 %s96, 1
        %s590 = smul.addr %s589, 128
        %s591 = scalar_lea.vmem [#allocation5], %s590
        // Predicated region
        $region37: #{tpu_custom_call.1} parent=31 // pred_check
          %p592 = pneg %p106
        $region38: #{tpu_custom_call.1} parent=31 // pred_check_branch
          %594 = sbr.rel (%p592) target = $region40
        $region39: #{tpu_custom_call.1} parent=31 // pred_region
          %596 = vsyncadd %s588, 0
          %s597 = smul.addr %s20, 16
          %s598 = smul.addr %s597, 8
          %s599 = scalar_lea.hbm %s3, %s598
          %s600 = sshll.u32 %s591, 4
          %s601 = int_to_ptr.vmem [resolvable:$true] %s600
          %s602 = sshll.u32 %s599, 4
          %s603 = int_to_ptr.hbm [resolvable:$true] %s602
          %608 = dma.vmem_to_hbm [thread:$0]  %s601, 2048, %s603, %s588, 256, 256, 16
        $region40: #{tpu_custom_call.1} parent=31 // pred_fallthru
          _
      $region32: #{tpu_custom_call.1} parent=5 // pred_fallthru
        _
      %p609 = scmp.le.s32.totalorder 2, %s15
      // Predicated region
      $region41: #{tpu_custom_call.1} parent=5 // pred_check
        %p610 = pneg %p609
      $region42: #{tpu_custom_call.1} parent=5 // pred_check_branch
        %612 = sbr.rel (%p610) target = $region44
      $region43: #{tpu_custom_call.1} parent=5 // pred_region
        %s613 = ssub.s32 %s15, 2
        // Predicated region
        $region45: #{tpu_custom_call.1} parent=43 // pred_check
          %p614 = pneg %p112
        $region46: #{tpu_custom_call.1} parent=43 // pred_check_branch
          %616 = sbr.rel (%p614) target = $region48
        $region47: #{tpu_custom_call.1} parent=43 // pred_region
          %s617 = sand.u32 %s97, 1
          %s618 = scalar_lea.sflag [#allocation4], %s617
          %s619 = sand.u32 %s97, 1
          %s620 = smul.addr %s619, 128
          %s621 = scalar_lea.vmem [#allocation5], %s620
          %623 = dma.done %s618, 2048
        $region48: #{tpu_custom_call.1} parent=43 // pred_fallthru
          _
      $region44: #{tpu_custom_call.1} parent=5 // pred_fallthru
        _
    $region6: #{tpu_custom_call.1} parent=1 // loop_footer
      %s19 = sadd.s32 1, %s15
    $region7: #{tpu_custom_call.1} parent=1 // loop_footer_branch
      %14 = sbr.rel target = $region3
    $region8: #{tpu_custom_call.1} parent=1 // loop_exit
      _
    %624 = vsyncpa [#allocation3], 1
    %s625 = scalar_lea.sflag [#allocation3], 1
    %626 = vsyncpa %s625, 1
    %627 = vsyncpa [#allocation4], 1
    %s628 = scalar_lea.sflag [#allocation4], 1
    %629 = vsyncpa %s628, 1

</llo_original>
